<compile_context>
chip_gen: v5e
topology: v5e:2x2
jax: 0.10.0
libtpu: 0.0.40
codegen_flags: <defaults>
</compile_context>

<pallas_src>
import functools

import jax
import jax.numpy as jnp
from jax.experimental import pallas as pl
from jax.experimental.pallas import tpu as pltpu


# ---------------------------------------------------------------------------
# Kernel
# ---------------------------------------------------------------------------
def _random_transform_kernel(x_ref, wy_ref, wxt_ref, mask_ref, maskc_ref, o_ref,
                             *, bblk, C, S, T):
    # x_ref     : (1, bblk*S, C*S)   rows = (b, src_row), lanes = (chan, src_col)
    # wy_ref    : (1, bblk*T, S)     row-interpolation weights, rows = (b, out_row)
    # wxt_ref   : (1, bblk*S, T)     per-image Wx^T stacked over b
    # mask_ref  : (bblk*T, bblk*S)   constant 0/1 batch block-diagonal mask (resident)
    # maskc_ref : (C*S, C*T)         constant 0/1 channel block-diagonal mask (resident)
    # o_ref     : (1, T, bblk*C*T)   lane-dense output slab
    x2 = x_ref[0].astype(jnp.float32)        # (bblk*S, C*S)
    wyf = wy_ref[0]                          # (bblk*T, S)  f32
    wxt = wxt_ref[0]                         # (bblk*S, T)  f32

    # ---- stage 1: row interpolation, folded over the batch block ----------
    # blockdiag(Wy_b) built in-registers: lane-replicate the dense weights and
    # zero the off-diagonal blocks with the resident mask (no HBM inflation).
    if bblk > 1:
        wy_bd = jnp.concatenate([wyf] * bblk, axis=1) * mask_ref[...]
    else:
        wy_bd = wyf                           # (T, S) degenerate case
    r = jnp.dot(wy_bd, x2, preferred_element_type=jnp.float32)   # (bblk*T, C*S) f32

    # ---- stage 2: column interpolation, one matmul per image --------------
    maskc = maskc_ref[...]
    outs = []
    for e in range(bblk):                     # static unroll (bblk is a Python int)
        r_e = r[e * T:(e + 1) * T, :]         # (T, C*S)
        wxt_e = wxt[e * S:(e + 1) * S, :]     # (S, T)
        if C > 1:
            w_rows = jnp.concatenate([wxt_e] * C, axis=0)          # (C*S, T)
            w_cbd = jnp.concatenate([w_rows] * C, axis=1) * maskc  # (C*S, C*T)
        else:
            w_cbd = wxt_e
        outs.append(jnp.dot(r_e, w_cbd, preferred_element_type=jnp.float32))  # (T, C*T)

    slab = outs[0] if bblk == 1 else jnp.concatenate(outs, axis=1)  # (T, bblk*C*T)
    o_ref[0] = slab.astype(o_ref.dtype)       # single lane-dense store


# ---------------------------------------------------------------------------
# Wrapper helpers
# ---------------------------------------------------------------------------
def _bilinear_weights(coords, src_size):
    """(B, T) pixel coords -> (B, T, S) bilinear weights (zero padding).

    f32 exact-compare construction; out-of-range neighbors never match -> 0.
    Coordinate math must stay in f32 (never bf16).
    """
    p = jnp.arange(src_size, dtype=jnp.float32)[None, None, :]     # (1, 1, S)
    c0 = jnp.floor(coords)[..., None]                              # (B, T, 1)
    frac = coords[..., None] - c0                                  # (B, T, 1)
    return (jnp.where(p == c0, 1.0 - frac, 0.0)
            + jnp.where(p == c0 + 1.0, frac, 0.0))


def _vmem_capacity_bytes():
    try:
        return int(pltpu.get_tpu_info().vmem_capacity_bytes)
    except Exception:
        return 64 << 20          # conservative (v7x per-TensorCore VMEM)


def _step_vmem_bytes(bb, C, S, T):
    io = bb * S * C * S + bb * T * S + bb * S * T + T * bb * C * T     # pipelined blocks
    resident = bb * T * bb * S + C * S * C * T                          # masks
    interm = bb * T * bb * S + bb * T * C * S + T * bb * C * T          # wy_bd, r, slab
    return 4 * (2 * io + resident + interm)


def _pick_batch_block(requested, B, C, S, T):
    budget = _vmem_capacity_bytes() // 4
    bb = max(1, min(int(requested), B))
    while bb > 1 and _step_vmem_bytes(bb, C, S, T) > budget:
        bb -= 1
    if B >= 2:                               # keep >= 2 grid steps (v7x megacore)
        bb = min(bb, pl.cdiv(B, 2))
    return max(1, bb)


# ---------------------------------------------------------------------------
# Wrapper
# ---------------------------------------------------------------------------
def random_transform(x, randgen=None, *, target_size, shift=8, fliplr=True,
                     flipud=False, batch_block=16):
    """Pallas implementation of RandomTransform.forward (mode='bilinear', align=True)."""
    B, C, S, _ = x.shape
    T = target_size
    op_dtype = x.dtype if x.dtype in (jnp.bfloat16, jnp.float32) else jnp.float32

    if randgen is None:
        # TODO(synk): PyTorch draws from the global torch RNG here; we use a fixed key.
        randgen = jax.random.uniform(jax.random.PRNGKey(0), (B, 4), dtype=jnp.float32)

    # ---- per-batch sampling coordinates (always f32; never bf16) ----
    k = float(T) / float(S)
    delta = jnp.linspace(0.0, 1.0, S, dtype=jnp.float32)[shift]    # == shift / (S-1)
    lin = jnp.linspace(-1.0, k, T, dtype=jnp.float32)              # grid template
    rg = randgen.astype(jnp.float32)
    gx = lin[None, :] + ((rg[:, 0] - 0.5) * 2.0 * delta)[:, None]  # (B, T)
    gy = lin[None, :] + ((rg[:, 1] - 0.5) * 2.0 * delta)[:, None]  # (B, T)
    if fliplr:
        gx = jnp.where((rg[:, 2] > 0.5)[:, None], -gx, gx)
    if flipud:
        gy = jnp.where((rg[:, 3] > 0.5)[:, None], -gy, gy)
    ix = (gx + 1.0) * 0.5 * (S - 1)                                # pixel coords (align=True)
    iy = (gy + 1.0) * 0.5 * (S - 1)

    wx = _bilinear_weights(ix, S)                                  # (B, T, S) f32
    wy = _bilinear_weights(iy, S)                                  # (B, T, S) f32

    # ---- batch block: fixed size, pad B up to a multiple of it ----
    bblk = _pick_batch_block(batch_block, B, C, S, T)
    nb = pl.cdiv(B, bblk)
    b_pad = nb * bblk
    if b_pad != B:
        pad = b_pad - B
        x = jnp.pad(x, ((0, pad), (0, 0), (0, 0), (0, 0)))
        wy = jnp.pad(wy, ((0, pad), (0, 0), (0, 0)))
        wx = jnp.pad(wx, ((0, pad), (0, 0), (0, 0)))

    # ---- kernel operand layouts (dense weights only; no block-diag over HBM) ----
    # x relayout: (B, C, S, S) -> (nb, bblk*S, C*S)   rows = (b, src_row)
    xq = jnp.transpose(x.astype(op_dtype), (0, 2, 1, 3)).reshape(nb, bblk * S, C * S)
    wyf = wy.reshape(nb, bblk * T, S)                               # free reshape
    wxt = jnp.transpose(wx, (0, 2, 1)).reshape(nb, bblk * S, T)     # tiny array
    mask = jnp.kron(jnp.eye(bblk, dtype=jnp.float32),
                    jnp.ones((T, S), jnp.float32))                  # (bblk*T, bblk*S)
    maskc = jnp.kron(jnp.eye(C, dtype=jnp.float32),
                     jnp.ones((S, T), jnp.float32))                 # (C*S, C*T)

    # ---- cost estimate: actual executed MXU flops / shipped bytes ----
    flops = nb * (2 * (bblk * T) * (bblk * S) * (C * S)
                  + bblk * 2 * T * (C * S) * (C * T))
    bytes_accessed = int(
        xq.size * jnp.dtype(xq.dtype).itemsize
        + (wyf.size + wxt.size + mask.size + maskc.size) * 4
        + nb * T * bblk * C * T * jnp.dtype(op_dtype).itemsize)
    cost = pl.CostEstimate(flops=flops, transcendentals=0,
                           bytes_accessed=bytes_accessed)

    vmem_limit = int(min(_vmem_capacity_bytes(),
                         max(32 << 20, 2 * _step_vmem_bytes(bblk, C, S, T))))

    kernel = functools.partial(_random_transform_kernel, bblk=bblk, C=C, S=S, T=T)
    out = pl.pallas_call(
        kernel,
        out_shape=jax.ShapeDtypeStruct((nb, T, bblk * C * T), op_dtype),
        grid_spec=pltpu.PrefetchScalarGridSpec(
            num_scalar_prefetch=0,
            grid=(nb,),
            in_specs=[
                pl.BlockSpec((1, bblk * S, C * S), lambda i: (i, 0, 0)),
                pl.BlockSpec((1, bblk * T, S), lambda i: (i, 0, 0)),
                pl.BlockSpec((1, bblk * S, T), lambda i: (i, 0, 0)),
                pl.BlockSpec((bblk * T, bblk * S), lambda i: (0, 0)),   # resident mask
                pl.BlockSpec((C * S, C * T), lambda i: (0, 0)),         # resident mask
            ],
            out_specs=pl.BlockSpec((1, T, bblk * C * T), lambda i: (i, 0, 0)),
        ),
        compiler_params=pltpu.CompilerParams(
            dimension_semantics=("parallel",),
            vmem_limit_bytes=vmem_limit),
        cost_estimate=cost,
    )(xq, wyf, wxt, mask, maskc)

    # (nb, T, bblk*C*T) -> (B, C, T, T): layout plumbing only, outside the kernel.
    out = out.reshape(nb, T, bblk, C, T)
    out = jnp.transpose(out, (0, 2, 3, 1, 4)).reshape(b_pad, C, T, T)
    return out[:B]


# ---------------------------------------------------------------------------
# Pure-JAX reference (explicit gather grid_sample) used only for verification.
# ---------------------------------------------------------------------------
def _grid_sample_ref(x, gx, gy):
    B, C, H, W = x.shape
    ix = (gx + 1.0) * 0.5 * (W - 1)                    # (B, T) columns
    iy = (gy + 1.0) * 0.5 * (H - 1)                    # (B, T) rows
    ix0 = jnp.floor(ix); ix1 = ix0 + 1.0
    iy0 = jnp.floor(iy); iy1 = iy0 + 1.0
    wx0, wx1 = ix1 - ix, ix - ix0
    wy0, wy1 = iy1 - iy, iy - iy0

    def gather(r, c):
        vr = (r >= 0) & (r < H)
        vc = (c >= 0) & (c < W)
        rc = jnp.clip(r, 0, H - 1).astype(jnp.int32)
        cc = jnp.clip(c, 0, W - 1).astype(jnp.int32)
        g = jax.vmap(lambda xb, ri, ci: xb[:, ri][:, :, ci])(x, rc, cc)  # (B,C,T,T)
        return g * (vr[:, None, :, None] & vc[:, None, None, :])

    return (wy0[:, None, :, None] * wx0[:, None, None, :] * gather(iy0, ix0)
            + wy0[:, None, :, None] * wx1[:, None, None, :] * gather(iy0, ix1)
            + wy1[:, None, :, None] * wx0[:, None, None, :] * gather(iy1, ix0)
            + wy1[:, None, :, None] * wx1[:, None, None, :] * gather(iy1, ix1))


def _reference(x, randgen, *, target_size, shift=8, fliplr=True, flipud=False):
    B, C, S, _ = x.shape
    T = target_size
    k = float(T) / float(S)
    delta = jnp.linspace(0.0, 1.0, S)[shift]
    lin = jnp.linspace(-1.0, k, T)
    gx = lin[None, :] + ((randgen[:, 0] - 0.5) * 2.0 * delta)[:, None]
    gy = lin[None, :] + ((randgen[:, 1] - 0.5) * 2.0 * delta)[:, None]
    if fliplr:
        gx = jnp.where((randgen[:, 2] > 0.5)[:, None], -gx, gx)
    if flipud:
        gy = jnp.where((randgen[:, 3] > 0.5)[:, None], -gy, gy)
    return _grid_sample_ref(x.astype(jnp.float32), gx, gy)


if __name__ == "__main__":
    key = jax.random.PRNGKey(0)
    kx, kr, kx2, kr2 = jax.random.split(key, 4)

    # Check 1: small shapes consistent with the module (batch=2, channels=4, spatial=16).
    B, C, S, T = 2, 4, 16, 12
    x = jax.random.normal(kx, (B, C, S, S), dtype=jnp.float32)
    randgen = jax.random.uniform(kr, (B, 4), dtype=jnp.float32)
    out = jax.block_until_ready(
        random_transform(x, randgen, target_size=T, shift=8, fliplr=True, flipud=False))
    ref = _reference(x, randgen, target_size=T, shift=8, fliplr=True, flipud=False)
    assert out.shape == (B, C, T, T)
    assert jnp.allclose(out, ref, atol=1e-4, rtol=1e-4), "mismatch vs reference (check 1)"

    # Check 2: exercises the batch-folded block-diagonal path and B padding (B=5 -> pad to 6).
    B2 = 5
    x2 = jax.random.normal(kx2, (B2, C, S, S), dtype=jnp.float32)
    rg2 = jax.random.uniform(kr2, (B2, 4), dtype=jnp.float32)
    out2 = jax.block_until_ready(
        random_transform(x2, rg2, target_size=T, shift=8, batch_block=4))
    ref2 = _reference(x2, rg2, target_size=T, shift=8)
    assert out2.shape == (B2, C, T, T)
    assert jnp.allclose(out2, ref2, atol=1e-4, rtol=1e-4), "mismatch vs reference (check 2)"

    print("KERNEL_OK")
</pallas_src>

<mosaic_0001>
module attributes {stable_mosaic.version = 11 : i64} {
  func.func @_random_transform_kernel(%arg0: i32, %arg1: memref<1x16x64xf32, #tpu.memory_space<vmem>>, %arg2: memref<1x12x16xf32, #tpu.memory_space<vmem>>, %arg3: memref<1x16x12xf32, #tpu.memory_space<vmem>>, %arg4: memref<12x16xf32, #tpu.memory_space<vmem>>, %arg5: memref<64x48xf32, #tpu.memory_space<vmem>>, %arg6: memref<1x12x48xf32, #tpu.memory_space<vmem>>) attributes {dimension_semantics = [#tpu.dimension_semantics<parallel>], iteration_bounds = array<i64: 2>, scalar_prefetch = 0 : i64, scratch_operands = 0 : i64, tpu.core_type = #tpu.core_type<tc>, window_params = [{transform_indices = @transform_0, window_bounds = array<i64: 1, 16, 64>}, {transform_indices = @transform_1, window_bounds = array<i64: 1, 12, 16>}, {transform_indices = @transform_2, window_bounds = array<i64: 1, 16, 12>}, {pipeline_mode = #tpu.pipeline_mode<synchronous>, transform_indices = @transform_3, window_bounds = array<i64: 12, 16>}, {pipeline_mode = #tpu.pipeline_mode<synchronous>, transform_indices = @transform_4, window_bounds = array<i64: 64, 48>}, {transform_indices = @transform_5, window_bounds = array<i64: 1, 12, 48>}]} {
    %c0 = arith.constant 0 : index
    %c0_0 = arith.constant 0 : index
    %c0_1 = arith.constant 0 : index
    %0 = vector.load %arg1[%c0, %c0_0, %c0_1] : memref<1x16x64xf32, #tpu.memory_space<vmem>>, vector<1x16x64xf32>
    %1 = vector.shape_cast %0 : vector<1x16x64xf32> to vector<16x64xf32>
    %c0_2 = arith.constant 0 : index
    %c0_3 = arith.constant 0 : index
    %c0_4 = arith.constant 0 : index
    %2 = vector.load %arg2[%c0_2, %c0_3, %c0_4] : memref<1x12x16xf32, #tpu.memory_space<vmem>>, vector<1x12x16xf32>
    %3 = vector.shape_cast %2 : vector<1x12x16xf32> to vector<12x16xf32>
    %c0_5 = arith.constant 0 : index
    %c0_6 = arith.constant 0 : index
    %c0_7 = arith.constant 0 : index
    %4 = vector.load %arg3[%c0_5, %c0_6, %c0_7] : memref<1x16x12xf32, #tpu.memory_space<vmem>>, vector<1x16x12xf32>
    %5 = vector.shape_cast %4 : vector<1x16x12xf32> to vector<16x12xf32>
    %cst = arith.constant dense<0.000000e+00> : vector<12x64xf32>
    %6 = tpu.matmul %3, %1, %cst {dimension_numbers = #tpu.dot_dimension_numbers<[1], [0], [0], [1], [0, 0, 1, 1], [], []>} : vector<12x16xf32>, vector<16x64xf32>, vector<12x64xf32> -> vector<12x64xf32>
    %c0_8 = arith.constant 0 : index
    %c0_9 = arith.constant 0 : index
    %7 = vector.load %arg5[%c0_8, %c0_9] : memref<64x48xf32, #tpu.memory_space<vmem>>, vector<64x48xf32>
    %8 = tpu.concatenate %5, %5, %5, %5 in 0 : vector<16x12xf32>, vector<16x12xf32>, vector<16x12xf32>, vector<16x12xf32> -> vector<64x12xf32>
    %9 = tpu.concatenate %8, %8, %8, %8 in 1 : vector<64x12xf32>, vector<64x12xf32>, vector<64x12xf32>, vector<64x12xf32> -> vector<64x48xf32>
    %10 = arith.mulf %9, %7 : vector<64x48xf32>
    %cst_10 = arith.constant dense<0.000000e+00> : vector<12x48xf32>
    %11 = tpu.matmul %6, %10, %cst_10 {dimension_numbers = #tpu.dot_dimension_numbers<[1], [0], [0], [1], [0, 0, 1, 1], [], []>} : vector<12x64xf32>, vector<64x48xf32>, vector<12x48xf32> -> vector<12x48xf32>
    %c0_11 = arith.constant 0 : index
    %c0_12 = arith.constant 0 : index
    %c0_13 = arith.constant 0 : index
    %12 = vector.load %arg6[%c0_11, %c0_12, %c0_13] : memref<1x12x48xf32, #tpu.memory_space<vmem>>, vector<1x12x48xf32>
    %13 = vector.shape_cast %12 : vector<1x12x48xf32> to vector<12x48xf32>
    %14 = vector.shape_cast %11 : vector<12x48xf32> to vector<1x12x48xf32>
    tpu.vector_store %arg6[%c0_11, %c0_12, %c0_13], %14 {strides = array<i32>} : memref<1x12x48xf32, #tpu.memory_space<vmem>>, vector<1x12x48xf32>,
    return
  }
  func.func @transform_0(%arg0: i32) -> (i32, i32, i32) {
    %c0_i32 = arith.constant 0 : i32
    %c0_i32_0 = arith.constant 0 : i32
    %c0_i32_1 = arith.constant 0 : i32
    return %arg0, %c0_i32, %c0_i32_0 : i32, i32, i32
  }
  func.func @transform_1(%arg0: i32) -> (i32, i32, i32) {
    %c0_i32 = arith.constant 0 : i32
    %c0_i32_0 = arith.constant 0 : i32
    %c0_i32_1 = arith.constant 0 : i32
    return %arg0, %c0_i32, %c0_i32_0 : i32, i32, i32
  }
  func.func @transform_2(%arg0: i32) -> (i32, i32, i32) {
    %c0_i32 = arith.constant 0 : i32
    %c0_i32_0 = arith.constant 0 : i32
    %c0_i32_1 = arith.constant 0 : i32
    return %arg0, %c0_i32, %c0_i32_0 : i32, i32, i32
  }
  func.func @transform_3(%arg0: i32) -> (i32, i32) {
    %c0_i32 = arith.constant 0 : i32
    %c0_i32_0 = arith.constant 0 : i32
    %c0_i32_1 = arith.constant 0 : i32
    return %c0_i32, %c0_i32_0 : i32, i32
  }
  func.func @transform_4(%arg0: i32) -> (i32, i32) {
    %c0_i32 = arith.constant 0 : i32
    %c0_i32_0 = arith.constant 0 : i32
    %c0_i32_1 = arith.constant 0 : i32
    return %c0_i32, %c0_i32_0 : i32, i32
  }
  func.func @transform_5(%arg0: i32) -> (i32, i32, i32) {
    %c0_i32 = arith.constant 0 : i32
    %c0_i32_0 = arith.constant 0 : i32
    %c0_i32_1 = arith.constant 0 : i32
    return %arg0, %c0_i32, %c0_i32_0 : i32, i32, i32
  }
}

</mosaic_0001>

<llo_original>
// kernel: tpu_custom_call.1
$region0: #{tpu_custom_call.1}
  #allocation0 [shape = 'u32[]', space=smem, size = 0x4, offset = 0x4, fixed_abs, tag = 'smem constant byte address 0x4 - core index']
  #allocation1 [shape = 'u32[72,128]{1,0:T(1,128)}', space=vmem, size = 0x9000, scoped, tag = 'internal scratch']
  %s0 = inlined_call_operand.vmem [shape: f32[2,16,64], index: 0, kind: input, shape index: {}]
  %s1 = inlined_call_operand.vmem [shape: f32[2,12,16], index: 1, kind: input, shape index: {}]
  %s2 = inlined_call_operand.vmem [shape: f32[2,16,12], index: 2, kind: input, shape index: {}]
  %s3 = inlined_call_operand.vmem [shape: f32[12,16], index: 3, kind: input, shape index: {}]
  %s4 = inlined_call_operand.vmem [shape: f32[64,48], index: 4, kind: input, shape index: {}]
  %s5 = inlined_call_operand.vmem [shape: f32[2,12,48], index: 5, kind: output, shape index: {}]
  %s6 = sld [smem:[#allocation0]]
  $region53: #{tpu_custom_call.1} parent=0
    _
  %s8 = ssub.s32 1, %s6
  %s9 = scalar_select 0, %s8, %s6
  loop: start=0, step=1, limit=4
  $region2: #{tpu_custom_call.1} parent=0 // loop_pre_header
    _
  $region3: #{tpu_custom_call.1} parent=0 // loop_header
    %s11 = sphi 0, %s15
    %p12 = scmp.ge.s32.totalorder %s11, 4
    %s21 = sphi 0, %s23
    %s24 = sphi 0, %s21
    %s25 = sphi 0, %s24
    %s41 = sphi 0, %s25
    %s47 = sphi 0, %s49
    %s50 = sphi 0, %s47
    %s51 = sphi 0, %s50
    %s67 = sphi 0, %s51
    %s73 = sphi 0, %s75
    %s76 = sphi 0, %s73
    %s77 = sphi 0, %s76
    %s93 = sphi 0, %s77
    %s97 = sphi 0, %s97
    %s99 = sphi 0, %s97
    %s100 = sphi 0, %s99
    %s114 = sphi 0, %s100
    %s118 = sphi 0, %s118
    %s120 = sphi 0, %s118
    %s121 = sphi 0, %s120
    %s135 = sphi 0, %s121
    %s141 = sphi 0, %s143
    %s144 = sphi 0, %s141
    %s145 = sphi 0, %s144
    %s161 = sphi 0, %s145
  $region4: #{tpu_custom_call.1} parent=0 // loop_header_branch
    %14 = sbr.rel (%p12) target = $region8
  $region5: #{tpu_custom_call.1} parent=0 // loop_body
    %s16 = ssub.s32 %s11, 1
    %s17 = ssub.s32 %s11, 2
    %s18 = sadd.s32 %s11, 1
    %s19 = ssub.s32 %s11, %s18
    %p20 = scmp.eq.s32.totalorder %s19, 0
    %s22 = sadd.s32 %s21, 1
    %s23 = scalar_select %p20, %s21, %s22
    %p26 = pneg %p20
    %p27 = scmp.eq.s32.totalorder %s11, 1
    %p28 = por %p26, %p27
    %p29 = scmp.ne.s32.totalorder %s21, %s24
    %p30 = scmp.eq.s32.totalorder %s11, 0
    %p31 = por %p29, %p30
    %p32 = scmp.ne.s32.totalorder %s21, %s24
    %p33 = scmp.eq.s32.totalorder %s16, 1
    %p34 = por %p32, %p33
    %p35 = scmp.ne.s32.totalorder %s24, %s25
    %p36 = scmp.eq.s32.totalorder %s16, 0
    %p37 = por %p35, %p36
    %p38 = scmp.ne.s32.totalorder %s24, %s25
    %p39 = scmp.eq.s32.totalorder %s17, 1
    %p40 = por %p38, %p39
    %p42 = scmp.ne.s32.totalorder %s25, %s41
    %p43 = scmp.eq.s32.totalorder %s17, 0
    %p44 = por %p42, %p43
    %s45 = ssub.s32 %s11, %s18
    %p46 = scmp.eq.s32.totalorder %s45, 0
    %s48 = sadd.s32 %s47, 1
    %s49 = scalar_select %p46, %s47, %s48
    %p52 = pneg %p46
    %p53 = scmp.eq.s32.totalorder %s11, 1
    %p54 = por %p52, %p53
    %p55 = scmp.ne.s32.totalorder %s47, %s50
    %p56 = scmp.eq.s32.totalorder %s11, 0
    %p57 = por %p55, %p56
    %p58 = scmp.ne.s32.totalorder %s47, %s50
    %p59 = scmp.eq.s32.totalorder %s16, 1
    %p60 = por %p58, %p59
    %p61 = scmp.ne.s32.totalorder %s50, %s51
    %p62 = scmp.eq.s32.totalorder %s16, 0
    %p63 = por %p61, %p62
    %p64 = scmp.ne.s32.totalorder %s50, %s51
    %p65 = scmp.eq.s32.totalorder %s17, 1
    %p66 = por %p64, %p65
    %p68 = scmp.ne.s32.totalorder %s51, %s67
    %p69 = scmp.eq.s32.totalorder %s17, 0
    %p70 = por %p68, %p69
    %s71 = ssub.s32 %s11, %s18
    %p72 = scmp.eq.s32.totalorder %s71, 0
    %s74 = sadd.s32 %s73, 1
    %s75 = scalar_select %p72, %s73, %s74
    %p78 = pneg %p72
    %p79 = scmp.eq.s32.totalorder %s11, 1
    %p80 = por %p78, %p79
    %p81 = scmp.ne.s32.totalorder %s73, %s76
    %p82 = scmp.eq.s32.totalorder %s11, 0
    %p83 = por %p81, %p82
    %p84 = scmp.ne.s32.totalorder %s73, %s76
    %p85 = scmp.eq.s32.totalorder %s16, 1
    %p86 = por %p84, %p85
    %p87 = scmp.ne.s32.totalorder %s76, %s77
    %p88 = scmp.eq.s32.totalorder %s16, 0
    %p89 = por %p87, %p88
    %p90 = scmp.ne.s32.totalorder %s76, %s77
    %p91 = scmp.eq.s32.totalorder %s17, 1
    %p92 = por %p90, %p91
    %p94 = scmp.ne.s32.totalorder %s77, %s93
    %p95 = scmp.eq.s32.totalorder %s17, 0
    %p96 = por %p94, %p95
    %s98 = sadd.s32 %s97, 1
    %p101 = scmp.eq.s32.totalorder %s11, 1
    %p102 = scmp.ne.s32.totalorder %s97, %s99
    %p103 = scmp.eq.s32.totalorder %s11, 0
    %p104 = por %p102, %p103
    %p105 = scmp.ne.s32.totalorder %s97, %s99
    %p106 = scmp.eq.s32.totalorder %s16, 1
    %p107 = por %p105, %p106
    %p108 = scmp.ne.s32.totalorder %s99, %s100
    %p109 = scmp.eq.s32.totalorder %s16, 0
    %p110 = por %p108, %p109
    %p111 = scmp.ne.s32.totalorder %s99, %s100
    %p112 = scmp.eq.s32.totalorder %s17, 1
    %p113 = por %p111, %p112
    %p115 = scmp.ne.s32.totalorder %s100, %s114
    %p116 = scmp.eq.s32.totalorder %s17, 0
    %p117 = por %p115, %p116
    %s119 = sadd.s32 %s118, 1
    %p122 = scmp.eq.s32.totalorder %s11, 1
    %p123 = scmp.ne.s32.totalorder %s118, %s120
    %p124 = scmp.eq.s32.totalorder %s11, 0
    %p125 = por %p123, %p124
    %p126 = scmp.ne.s32.totalorder %s118, %s120
    %p127 = scmp.eq.s32.totalorder %s16, 1
    %p128 = por %p126, %p127
    %p129 = scmp.ne.s32.totalorder %s120, %s121
    %p130 = scmp.eq.s32.totalorder %s16, 0
    %p131 = por %p129, %p130
    %p132 = scmp.ne.s32.totalorder %s120, %s121
    %p133 = scmp.eq.s32.totalorder %s17, 1
    %p134 = por %p132, %p133
    %p136 = scmp.ne.s32.totalorder %s121, %s135
    %p137 = scmp.eq.s32.totalorder %s17, 0
    %p138 = por %p136, %p137
    %s139 = ssub.s32 %s11, %s18
    %p140 = scmp.eq.s32.totalorder %s139, 0
    %s142 = sadd.s32 %s141, 1
    %s143 = scalar_select %p140, %s141, %s142
    %p146 = pneg %p140
    %p147 = scmp.eq.s32.totalorder %s11, 1
    %p148 = por %p146, %p147
    %p149 = scmp.ne.s32.totalorder %s141, %s144
    %p150 = scmp.eq.s32.totalorder %s11, 0
    %p151 = por %p149, %p150
    %p152 = scmp.ne.s32.totalorder %s141, %s144
    %p153 = scmp.eq.s32.totalorder %s16, 1
    %p154 = por %p152, %p153
    %p155 = scmp.ne.s32.totalorder %s144, %s145
    %p156 = scmp.eq.s32.totalorder %s16, 0
    %p157 = por %p155, %p156
    %p158 = scmp.ne.s32.totalorder %s144, %s145
    %p159 = scmp.eq.s32.totalorder %s17, 1
    %p160 = por %p158, %p159
    %p162 = scmp.ne.s32.totalorder %s145, %s161
    %p163 = scmp.eq.s32.totalorder %s17, 0
    %p164 = por %p162, %p163
    %p165 = scmp.le.s32.totalorder 1, %s11
    %p166 = scmp.lt.s32.totalorder %s11, 3
    %p167 = pnand %p165, %p166
    %p168 = pneg %p167
    // Predicated region
    $region9: #{tpu_custom_call.1} parent=5 // pred_check
      _
    $region10: #{tpu_custom_call.1} parent=5 // pred_check_branch
      %170 = sbr.rel (%p167) target = $region12
    $region11: #{tpu_custom_call.1} parent=5 // pred_region
      %s171 = ssub.s32 %s11, 1
      // Predicated region
      $region13: #{tpu_custom_call.1} parent=11 // pred_check
        %p172 = pneg %p110
      $region14: #{tpu_custom_call.1} parent=11 // pred_check_branch
        %174 = sbr.rel (%p172) target = $region16
      $region15: #{tpu_custom_call.1} parent=11 // pred_region
        _
      $region16: #{tpu_custom_call.1} parent=11 // pred_fallthru
        _
      // Predicated region
      $region17: #{tpu_custom_call.1} parent=11 // pred_check
        %p175 = pneg %p131
      $region18: #{tpu_custom_call.1} parent=11 // pred_check_branch
        %177 = sbr.rel (%p175) target = $region20
      $region19: #{tpu_custom_call.1} parent=11 // pred_region
        _
      $region20: #{tpu_custom_call.1} parent=11 // pred_fallthru
        _
    $region12: #{tpu_custom_call.1} parent=5 // pred_fallthru
      _
    %p178 = scmp.lt.s32.totalorder %s11, 2
    // Predicated region
    $region21: #{tpu_custom_call.1} parent=5 // pred_check
      %p179 = pneg %p178
    $region22: #{tpu_custom_call.1} parent=5 // pred_check_branch
      %181 = sbr.rel (%p179) target = $region24
    $region23: #{tpu_custom_call.1} parent=5 // pred_region
      // Predicated region
      $region25: #{tpu_custom_call.1} parent=23 // pred_check
        %p182 = pneg %p31
      $region26: #{tpu_custom_call.1} parent=23 // pred_check_branch
        %184 = sbr.rel (%p182) target = $region28
      $region27: #{tpu_custom_call.1} parent=23 // pred_region
        %p185 = scmp.lt.s32.totalorder %s11, 1
        %s186 = scalar_select %p185, %s11, 1
        %s187 = smul.addr %s186, 2
        %s188 = smul.addr %s187, 8
        %s189 = scalar_lea.vmem %s0, %s188
      $region28: #{tpu_custom_call.1} parent=23 // pred_fallthru
        _
      // Predicated region
      $region29: #{tpu_custom_call.1} parent=23 // pred_check
        %p190 = pneg %p57
      $region30: #{tpu_custom_call.1} parent=23 // pred_check_branch
        %192 = sbr.rel (%p190) target = $region32
      $region31: #{tpu_custom_call.1} parent=23 // pred_region
        %p193 = scmp.lt.s32.totalorder %s11, 1
        %s194 = scalar_select %p193, %s11, 1
        %s195 = smul.addr %s194, 2
        %s196 = smul.addr %s195, 8
        %s197 = scalar_lea.vmem %s1, %s196
      $region32: #{tpu_custom_call.1} parent=23 // pred_fallthru
        _
      // Predicated region
      $region33: #{tpu_custom_call.1} parent=23 // pred_check
        %p198 = pneg %p83
      $region34: #{tpu_custom_call.1} parent=23 // pred_check_branch
        %200 = sbr.rel (%p198) target = $region36
      $region35: #{tpu_custom_call.1} parent=23 // pred_region
        %p201 = scmp.lt.s32.totalorder %s11, 1
        %s202 = scalar_select %p201, %s11, 1
        %s203 = smul.addr %s202, 2
        %s204 = smul.addr %s203, 8
        %s205 = scalar_lea.vmem %s2, %s204
      $region36: #{tpu_custom_call.1} parent=23 // pred_fallthru
        _
    $region24: #{tpu_custom_call.1} parent=5 // pred_fallthru
      _
    %p206 = scmp.le.s32.totalorder 1, %s11
    %p207 = scmp.lt.s32.totalorder %s11, 3
    %p208 = pnand %p206, %p207
    %p209 = pneg %p208
    // Predicated region
    $region37: #{tpu_custom_call.1} parent=5 // pred_check
      _
    $region38: #{tpu_custom_call.1} parent=5 // pred_check_branch
      %211 = sbr.rel (%p208) target = $region40
    $region39: #{tpu_custom_call.1} parent=5 // pred_region
      %s212 = ssub.s32 %s11, 1
      %p213 = scmp.lt.s32.totalorder %s16, 1
      %s214 = scalar_select %p213, %s16, 1
      %s215 = smul.addr %s214, 2
      %s216 = smul.addr %s215, 8
      %s217 = scalar_lea.vmem %s0, %s216
      %p218 = pneg %p37
      %p219 = pneg %p34
      %p220 = scmp.lt.s32.totalorder %s16, 1
      %s221 = scalar_select %p220, %s16, 1
      %s222 = smul.addr %s221, 2
      %s223 = smul.addr %s222, 8
      %s224 = scalar_lea.vmem %s1, %s223
      %p225 = pneg %p63
      %p226 = pneg %p60
      %p227 = scmp.lt.s32.totalorder %s16, 1
      %s228 = scalar_select %p227, %s16, 1
      %s229 = smul.addr %s228, 2
      %s230 = smul.addr %s229, 8
      %s231 = scalar_lea.vmem %s2, %s230
      %p232 = pneg %p89
      %p233 = pneg %p86
      %p234 = pneg %p110
      %p235 = pneg %p107
      %p236 = pneg %p131
      %p237 = pneg %p128
      %p238 = pneg %p157
      %p239 = pneg %p154
      %p240 = scmp.lt.s32.totalorder %s16, 1
      %s241 = scalar_select %p240, %s16, 1
      %s242 = smul.addr %s241, 2
      %s243 = smul.addr %s242, 8
      %s244 = scalar_lea.vmem %s5, %s243
      %p245 = scmp.lt.s32.totalorder %s16, 1
      %s246 = scalar_select %p245, %s16, 1
      %s247 = smul.addr %s246, 2
      %s248 = smul.addr %s247, 8
      %s249 = scalar_lea.vmem %s0, %s248
      %p250 = scmp.lt.s32.totalorder %s16, 1
      %s251 = scalar_select %p250, %s16, 1
      %s252 = smul.addr %s251, 2
      %s253 = smul.addr %s252, 8
      %s254 = scalar_lea.vmem %s1, %s253
      %p255 = scmp.lt.s32.totalorder %s16, 1
      %s256 = scalar_select %p255, %s16, 1
      %s257 = smul.addr %s256, 2
      %s258 = smul.addr %s257, 8
      %s259 = scalar_lea.vmem %s2, %s258
      %p260 = scmp.lt.s32.totalorder %s16, 1
      %s261 = scalar_select %p260, %s16, 1
      %s262 = smul.addr %s261, 2
      %s263 = smul.addr %s262, 8
      %s264 = scalar_lea.vmem %s5, %s263
      %v265 = vld [vmem:[%s249] sm:$0xff]
      %v266 = vld [vmem:[%s249 + $0x8] sm:$0xff]
      %v267 = vld [vmem:[%s254] sm:$0xff]
      %v268 = vld [vmem:[%s254 + $0x8] sm:$0xf]
      %v269 = vld [vmem:[%s259] sm:$0xff]
      %v270 = vld [vmem:[%s259 + $0x8] sm:$0xff]
      %vm271 = vcmask 130048
      %v273 = vsel %vm271, %v267, 0
      %v276 = vsel %vm271, %v268, 0
      %278 = vmatpush.msra.mxu0 0.0
      %279 = vmatpush.msra.mxu0 0.0
      %280 = vmatpush.msra.mxu0 0.0
      %281 = vmatpush.msra.mxu0 0.0
      %282 = vmatpush.msra.mxu0 0.0
      %283 = vmatpush.msra.mxu0 0.0
      %284 = vmatpush.msra.mxu0 0.0
      %285 = vmatpush.msra.mxu0 0.0
      %286 = vmatpush.msra.mxu0 0.0
      %287 = vmatpush.msra.mxu0 0.0
      %288 = vmatpush.msra.mxu0 0.0
      %289 = vmatpush.msra.mxu0 0.0
      %290 = vmatpush.msra.mxu0 0.0
      %291 = vmatpush.msra.mxu0 0.0
      %292 = vmatpush.msra.mxu0 %v266
      %293 = vmatpush.msra.mxu0 %v265
      %294 = vmatmul.f32.gmra.mxu0 %v273
      %v295 = vpop.f32.mrf.mxu0
      %v296 = vadd.f32 0.0, %v295
      %297 = vmatmul.f32.gmra.mxu0 %v276
      %v298 = vpop.f32.mrf.mxu0
      %v299 = vadd.f32 0.0, %v298
      %300 = vdwg.mxu0
      %v301 = vld [vmem:[%s4] sm:$0xff]
      %v302 = vld [vmem:[%s4 + $0x8] sm:$0xff]
      %v303 = vld [vmem:[%s4 + $0x10] sm:$0xff]
      %v304 = vld [vmem:[%s4 + $0x18] sm:$0xff]
      %v305 = vld [vmem:[%s4 + $0x20] sm:$0xff]
      %v306 = vld [vmem:[%s4 + $0x28] sm:$0xff]
      %v307 = vld [vmem:[%s4 + $0x30] sm:$0xff]
      %v308 = vld [vmem:[%s4 + $0x38] sm:$0xff]
      %311 = vrot.lane.b32.xlu0 %v269, 12
      %v312 = vpop.permute.xlu0 %311
      %313 = vrot.lane.b32.xlu0 %v270, 12
      %v314 = vpop.permute.xlu0 %313
      %317 = vrot.lane.b32.xlu0 %v269, 24
      %v318 = vpop.permute.xlu0 %317
      %319 = vrot.lane.b32.xlu0 %v270, 24
      %v320 = vpop.permute.xlu0 %319
      %323 = vrot.lane.b32.xlu0 %v269, 36
      %v324 = vpop.permute.xlu0 %323
      %325 = vrot.lane.b32.xlu0 %v270, 36
      %v326 = vpop.permute.xlu0 %325
      %vm329 = vcmask 97280
      %v330 = vsel %vm329, %v269, %v312
      %v331 = vsel %vm329, %v270, %v314
      %vm332 = vcmask 195584
      %v333 = vsel %vm332, %v330, %v318
      %v334 = vsel %vm332, %v331, %v320
      %vm335 = vcmask 293888
      %v336 = vsel %vm335, %v333, %v324
      %v337 = vsel %vm335, %v334, %v326
      %v338 = vmul.f32 %v336, %v301
      %v339 = vmul.f32 %v337, %v302
      %v340 = vmul.f32 %v336, %v303
      %v341 = vmul.f32 %v337, %v304
      %v342 = vmul.f32 %v336, %v305
      %v343 = vmul.f32 %v337, %v306
      %v344 = vmul.f32 %v336, %v307
      %v345 = vmul.f32 %v337, %v308
      %vm346 = vcmask 523264
      %v348 = vsel %vm346, %v296, 0
      %v351 = vsel %vm346, %v299, 0
      %353 = vmatpush.msra.mxu0 0.0
      %354 = vmatpush.msra.mxu0 0.0
      %355 = vmatpush.msra.mxu0 0.0
      %356 = vmatpush.msra.mxu0 0.0
      %357 = vmatpush.msra.mxu0 0.0
      %358 = vmatpush.msra.mxu0 0.0
      %359 = vmatpush.msra.mxu0 0.0
      %360 = vmatpush.msra.mxu0 0.0
      %361 = vmatpush.msra.mxu0 %v345
      %362 = vmatpush.msra.mxu0 %v344
      %363 = vmatpush.msra.mxu0 %v343
      %364 = vmatpush.msra.mxu0 %v342
      %365 = vmatpush.msra.mxu0 %v341
      %366 = vmatpush.msra.mxu0 %v340
      %367 = vmatpush.msra.mxu0 %v339
      %368 = vmatpush.msra.mxu0 %v338
      %369 = vmatmul.f32.gmra.mxu0 %v348
      %v370 = vpop.f32.mrf.mxu0
      %v371 = vadd.f32 0.0, %v370
      %372 = vmatmul.f32.gmra.mxu0 %v351
      %v373 = vpop.f32.mrf.mxu0
      %v374 = vadd.f32 0.0, %v373
      %375 = vdwg.mxu0
      %vm376 = vcmask 392192
      %377 = vst.msk [vmem:[%s264] sm:$0xff] %vm376, %v371
      %vm378 = vcmask 388096
      %379 = vst.msk [vmem:[%s264 + $0x8] sm:$0xf] %vm378, %v374
      %p380 = scmp.lt.s32.totalorder %s16, 1
      %s381 = scalar_select %p380, %s16, 1
      %s382 = smul.addr %s381, 2
      %s383 = smul.addr %s382, 8
      %s384 = scalar_lea.vmem %s5, %s383
      // Predicated region
      $region41: #{tpu_custom_call.1} parent=39 // pred_check
        %p385 = pneg %p154
      $region42: #{tpu_custom_call.1} parent=39 // pred_check_branch
        %387 = sbr.rel (%p385) target = $region44
      $region43: #{tpu_custom_call.1} parent=39 // pred_region
        _
      $region44: #{tpu_custom_call.1} parent=39 // pred_fallthru
        _
    $region40: #{tpu_custom_call.1} parent=5 // pred_fallthru
      _
    %p388 = scmp.le.s32.totalorder 2, %s11
    // Predicated region
    $region45: #{tpu_custom_call.1} parent=5 // pred_check
      %p389 = pneg %p388
    $region46: #{tpu_custom_call.1} parent=5 // pred_check_branch
      %391 = sbr.rel (%p389) target = $region48
    $region47: #{tpu_custom_call.1} parent=5 // pred_region
      %s392 = ssub.s32 %s11, 2
      // Predicated region
      $region49: #{tpu_custom_call.1} parent=47 // pred_check
        %p393 = pneg %p160
      $region50: #{tpu_custom_call.1} parent=47 // pred_check_branch
        %395 = sbr.rel (%p393) target = $region52
      $region51: #{tpu_custom_call.1} parent=47 // pred_region
        %p396 = scmp.lt.s32.totalorder %s17, 1
        %s397 = scalar_select %p396, %s17, 1
        %s398 = smul.addr %s397, 2
        %s399 = smul.addr %s398, 8
        %s400 = scalar_lea.vmem %s5, %s399
      $region52: #{tpu_custom_call.1} parent=47 // pred_fallthru
        _
    $region48: #{tpu_custom_call.1} parent=5 // pred_fallthru
      _
  $region6: #{tpu_custom_call.1} parent=0 // loop_footer
    %s15 = sadd.s32 1, %s11
  $region7: #{tpu_custom_call.1} parent=0 // loop_footer_branch
    %10 = sbr.rel target = $region3
  $region8: #{tpu_custom_call.1} parent=0 // loop_exit
    _

</llo_original>
